<compile_context>
chip_gen: v7x
topology: tpu7x:2x2x1
jax: 0.10.0
libtpu: 0.0.40
codegen_flags: <defaults>
</compile_context>

<pallas_src>
import jax
import jax.numpy as jnp
from jax.experimental import pallas as pl
from jax.experimental.pallas import tpu as pltpu

HID = 64            # per-branch hidden width
W = 2 * HID         # fused lane width (128)
BIAS_ROWS = 8       # bias block padded to a full f32 sublane group
MAX_BATCH_TILE = 2048
MIN_SPLIT_ROWS = 256   # v7x: give both TensorCores work once B >= this


def _round_up(x, m):
    return (x + m - 1) // m * m


def _cdiv(a, b):
    return (a + b - 1) // b


# ----------------------------------------------------------------------------
# Pallas kernel: fused actor+critic forward (3 bf16 MXU matmuls, f32 accum).
# ----------------------------------------------------------------------------
def mlp_policy_kernel(x_ref, w_ref, b_ref, out_ref):
    ni_pad = x_ref.shape[1]                       # static at trace time
    bf16 = jnp.bfloat16

    x = x_ref[...].astype(bf16)                   # (TB, ni_pad) bf16 operands

    # Static, 16-aligned slices of the packed bf16 weight slab (free views).
    w1 = w_ref[0:ni_pad, :]                       # (ni_pad, 128)
    w2 = w_ref[ni_pad:ni_pad + W, :]              # (128, 128) block-diagonal
    w3 = w_ref[ni_pad + W:ni_pad + 2 * W, :]      # (128, 128) value head + identity

    # f32 bias rows (exact; biases are tiny).
    b1 = b_ref[0:1, :]
    b2 = b_ref[1:2, :]
    b3 = b_ref[2:3, :]

    # Layer 1 (both branches): tanh(x @ W1 + b1)  -> (TB, 128), f32 accum/tanh.
    h = jnp.tanh(jnp.dot(x, w1, preferred_element_type=jnp.float32) + b1)
    # Layer 2 (both branches, block-diagonal): tanh(h @ W2 + b2)
    h = jnp.tanh(
        jnp.dot(h.astype(bf16), w2, preferred_element_type=jnp.float32) + b2)
    # Output: actor pass-through in lanes 0-63, value (v_fc3) in lane 64.
    out = jnp.dot(h.astype(bf16), w3, preferred_element_type=jnp.float32) + b3
    out_ref[...] = out.astype(out_ref.dtype)


# ----------------------------------------------------------------------------
# Parameter init replicating weights_init_mlp:
#   W ~ N(0, 1), each row (over in_features) divided by its L2 norm; bias = 0.
#   PyTorch weight shape is (out, in); we normalize along `in`, then store
#   transposed as (in, out) for the kernel layout.
# ----------------------------------------------------------------------------
def init_linear(key, in_features, out_features, dtype=jnp.float32):
    w = jax.random.normal(key, (out_features, in_features), dtype=dtype)
    norm = jnp.sqrt(jnp.sum(w * w, axis=1, keepdims=True))
    w = w / norm
    b = jnp.zeros((1, out_features), dtype=dtype)
    return w.T, b  # (in, out), (1, out)


def make_mlp_policy_params(num_inputs, seed=0, dtype=jnp.float32):
    keys = jax.random.split(jax.random.PRNGKey(seed), 5)
    a_w1, a_b1 = init_linear(keys[0], num_inputs, HID, dtype)
    a_w2, a_b2 = init_linear(keys[1], HID, HID, dtype)
    v_w1, v_b1 = init_linear(keys[2], num_inputs, HID, dtype)
    v_w2, v_b2 = init_linear(keys[3], HID, HID, dtype)
    v_w3, v_b3 = init_linear(keys[4], HID, 1, dtype)
    return {
        "a_fc1": (a_w1, a_b1),
        "a_fc2": (a_w2, a_b2),
        "v_fc1": (v_w1, v_b1),
        "v_fc2": (v_w2, v_b2),
        "v_fc3": (v_w3, v_b3),
    }


# ----------------------------------------------------------------------------
# Pack the 5 Linear layers into:
#   * one contiguous (ni_pad + 256, 128) bf16 weight slab
#     rows: [W1_packed | W2_blockdiag | W3_(value head + actor identity)]
#     (ni_pad rounded to 16 so every bf16 slice is sublane-pack aligned)
#   * one (8, 128) f32 bias block: rows 0..2 = b1, b2, b3.
# ----------------------------------------------------------------------------
def pack_mlp_policy_params(params, num_inputs, w_dtype=jnp.bfloat16):
    ni_pad = _round_up(num_inputs, 16)
    f32 = jnp.float32

    aw1, ab1 = params["a_fc1"]
    aw2, ab2 = params["a_fc2"]
    vw1, vb1 = params["v_fc1"]
    vw2, vb2 = params["v_fc2"]
    vw3, vb3 = params["v_fc3"]

    w1 = jnp.zeros((ni_pad, W), f32)
    w1 = w1.at[:num_inputs, 0:HID].set(vw1).at[:num_inputs, HID:W].set(aw1)
    b1 = jnp.zeros((1, W), f32).at[:, 0:HID].set(vb1).at[:, HID:W].set(ab1)

    w2 = jnp.zeros((W, W), f32)
    w2 = w2.at[0:HID, 0:HID].set(vw2).at[HID:W, HID:W].set(aw2)
    b2 = jnp.zeros((1, W), f32).at[:, 0:HID].set(vb2).at[:, HID:W].set(ab2)

    w3 = jnp.zeros((W, W), f32)
    w3 = w3.at[HID:W, 0:HID].set(jnp.eye(HID, dtype=f32))  # actor -> lanes 0-63
    w3 = w3.at[0:HID, HID:HID + 1].set(vw3)                # value -> lane 64
    b3 = jnp.zeros((1, W), f32).at[:, HID:HID + 1].set(vb3)

    w_slab = jnp.concatenate([w1, w2, w3], axis=0).astype(w_dtype)
    bias = jnp.zeros((BIAS_ROWS, W), f32).at[0:1].set(b1).at[1:2].set(b2).at[2:3].set(b3)
    return w_slab, bias


# ----------------------------------------------------------------------------
# Wrapper: mirrors MLPPolicy.forward(inputs, states, masks)
#          -> (value, actor_features, states)
# ----------------------------------------------------------------------------
def mlp_policy_forward(packed, inputs, states, masks):
    w_slab, bias = packed
    B, ni = inputs.shape
    dtype = inputs.dtype
    ni_pad = w_slab.shape[0] - 2 * W

    # Balanced batch tiles: few, (near-)full grid steps; >=2 steps once the
    # batch is large enough for megacore sharding to matter (v7x).
    n_blocks = max(1, _cdiv(B, MAX_BATCH_TILE))
    if B >= MIN_SPLIT_ROWS and n_blocks < 2:
        n_blocks = 2
    tb = _round_up(_cdiv(B, n_blocks), 8)
    b_pad = tb * n_blocks

    if b_pad != B or ni_pad != ni:
        x = jnp.zeros((b_pad, ni_pad), dtype).at[:B, :ni].set(inputs)
    else:
        x = inputs

    out = pl.pallas_call(
        mlp_policy_kernel,
        out_shape=jax.ShapeDtypeStruct((b_pad, W), dtype),
        grid=(n_blocks,),
        in_specs=[
            pl.BlockSpec((tb, ni_pad), lambda i: (i, 0)),
            pl.BlockSpec(w_slab.shape, lambda i: (0, 0)),   # weights stay resident
            pl.BlockSpec(bias.shape, lambda i: (0, 0)),     # f32 biases resident
        ],
        out_specs=pl.BlockSpec((tb, W), lambda i: (i, 0)),
        compiler_params=pltpu.CompilerParams(
            dimension_semantics=("parallel",)),
    )(x, w_slab, bias)

    actor = out[:B, 0:HID]
    value = out[:B, HID:HID + 1]
    # masks/states are untouched by forward(); states is passed through.
    return value, actor, states


# ----------------------------------------------------------------------------
# Pure-JAX f32 reference for verification (unpacked per-layer params).
# ----------------------------------------------------------------------------
def mlp_policy_forward_ref(params, inputs, states, masks):
    vw1, vb1 = params["v_fc1"]
    vw2, vb2 = params["v_fc2"]
    vw3, vb3 = params["v_fc3"]
    aw1, ab1 = params["a_fc1"]
    aw2, ab2 = params["a_fc2"]
    h = jnp.tanh(inputs @ vw1 + vb1)
    h = jnp.tanh(h @ vw2 + vb2)
    value = h @ vw3 + vb3
    a = jnp.tanh(inputs @ aw1 + ab1)
    a = jnp.tanh(a @ aw2 + ab2)
    return value, a, states


if __name__ == "__main__":
    B = 4            # batch (number of env steps)
    NUM_INPUTS = 32  # observation dim

    key = jax.random.PRNGKey(0)
    k_x, k_x2 = jax.random.split(key)
    inputs = jax.random.normal(k_x, (B, NUM_INPUTS), dtype=jnp.float32)
    states = jnp.zeros((B, 1), dtype=jnp.float32)   # state_size = 1
    masks = jnp.ones((B, 1), dtype=jnp.float32)

    params = make_mlp_policy_params(NUM_INPUTS, seed=0)
    packed = pack_mlp_policy_params(params, NUM_INPUTS)

    value, actor, states_out = mlp_policy_forward(packed, inputs, states, masks)
    jax.block_until_ready((value, actor, states_out))

    v_ref, a_ref, _ = mlp_policy_forward_ref(params, inputs, states, masks)
    assert value.shape == (B, 1) and actor.shape == (B, HID)
    # bf16 MXU operands (f32 accumulation) -> loosened tolerance vs f32 ref.
    assert jnp.allclose(value, v_ref, atol=7e-2, rtol=7e-2)
    assert jnp.allclose(actor, a_ref, atol=7e-2, rtol=7e-2)

    # Second check: multi-block grid path (balanced tiles, 2 parallel steps).
    B2 = 272
    inputs2 = jax.random.normal(k_x2, (B2, NUM_INPUTS), dtype=jnp.float32)
    states2 = jnp.zeros((B2, 1), dtype=jnp.float32)
    masks2 = jnp.ones((B2, 1), dtype=jnp.float32)
    value2, actor2, _ = mlp_policy_forward(packed, inputs2, states2, masks2)
    jax.block_until_ready((value2, actor2))
    v_ref2, a_ref2, _ = mlp_policy_forward_ref(params, inputs2, states2, masks2)
    assert value2.shape == (B2, 1) and actor2.shape == (B2, HID)
    assert jnp.allclose(value2, v_ref2, atol=7e-2, rtol=7e-2)
    assert jnp.allclose(actor2, a_ref2, atol=7e-2, rtol=7e-2)

    print("KERNEL_OK")
</pallas_src>

<mosaic_0001>
module attributes {stable_mosaic.version = 11 : i64} {
  func.func @mlp_policy_kernel(%arg0: i32, %arg1: memref<8x32xf32, #tpu.memory_space<vmem>>, %arg2: memref<288x128xbf16, #tpu.memory_space<vmem>>, %arg3: memref<8x128xf32, #tpu.memory_space<vmem>>, %arg4: memref<8x128xf32, #tpu.memory_space<vmem>>) attributes {dimension_semantics = [#tpu.dimension_semantics<parallel>], iteration_bounds = array<i64: 1>, scalar_prefetch = 0 : i64, scratch_operands = 0 : i64, tpu.core_type = #tpu.core_type<tc>, window_params = [{transform_indices = @transform_0, window_bounds = array<i64: 8, 32>}, {pipeline_mode = #tpu.pipeline_mode<synchronous>, transform_indices = @transform_1, window_bounds = array<i64: 288, 128>}, {pipeline_mode = #tpu.pipeline_mode<synchronous>, transform_indices = @transform_2, window_bounds = array<i64: 8, 128>}, {transform_indices = @transform_3, window_bounds = array<i64: 8, 128>}]} {
    %c0 = arith.constant 0 : index
    %c0_0 = arith.constant 0 : index
    %0 = vector.load %arg1[%c0, %c0_0] : memref<8x32xf32, #tpu.memory_space<vmem>>, vector<8x32xf32>
    %1 = arith.truncf %0 : vector<8x32xf32> to vector<8x32xbf16>
    %c0_1 = arith.constant 0 : index
    %c0_2 = arith.constant 0 : index
    %2 = vector.load %arg2[%c0_1, %c0_2] : memref<288x128xbf16, #tpu.memory_space<vmem>>, vector<32x128xbf16>
    %c32 = arith.constant 32 : index
    %c0_3 = arith.constant 0 : index
    %3 = vector.load %arg2[%c32, %c0_3] : memref<288x128xbf16, #tpu.memory_space<vmem>>, vector<128x128xbf16>
    %c160 = arith.constant 160 : index
    %c0_4 = arith.constant 0 : index
    %4 = vector.load %arg2[%c160, %c0_4] : memref<288x128xbf16, #tpu.memory_space<vmem>>, vector<128x128xbf16>
    %c0_5 = arith.constant 0 : index
    %c0_6 = arith.constant 0 : index
    %5 = vector.load %arg3[%c0_5, %c0_6] : memref<8x128xf32, #tpu.memory_space<vmem>>, vector<1x128xf32>
    %c1 = arith.constant 1 : index
    %c0_7 = arith.constant 0 : index
    %6 = vector.load %arg3[%c1, %c0_7] : memref<8x128xf32, #tpu.memory_space<vmem>>, vector<1x128xf32>
    %c2 = arith.constant 2 : index
    %c0_8 = arith.constant 0 : index
    %7 = vector.load %arg3[%c2, %c0_8] : memref<8x128xf32, #tpu.memory_space<vmem>>, vector<1x128xf32>
    %cst = arith.constant dense<0.000000e+00> : vector<8x128xf32>
    %8 = tpu.matmul %1, %2, %cst {dimension_numbers = #tpu.dot_dimension_numbers<[1], [0], [0], [1], [0, 0, 1, 1], [], []>} : vector<8x32xbf16>, vector<32x128xbf16>, vector<8x128xf32> -> vector<8x128xf32>
    %9 = vector.broadcast %5 : vector<1x128xf32> to vector<8x128xf32>
    %10 = arith.addf %8, %9 : vector<8x128xf32>
    %11 = math.tanh %10 : vector<8x128xf32>
    %12 = arith.truncf %11 : vector<8x128xf32> to vector<8x128xbf16>
    %cst_9 = arith.constant dense<0.000000e+00> : vector<8x128xf32>
    %13 = tpu.matmul %12, %3, %cst_9 {dimension_numbers = #tpu.dot_dimension_numbers<[1], [0], [0], [1], [0, 0, 1, 1], [], []>} : vector<8x128xbf16>, vector<128x128xbf16>, vector<8x128xf32> -> vector<8x128xf32>
    %14 = vector.broadcast %6 : vector<1x128xf32> to vector<8x128xf32>
    %15 = arith.addf %13, %14 : vector<8x128xf32>
    %16 = math.tanh %15 : vector<8x128xf32>
    %17 = arith.truncf %16 : vector<8x128xf32> to vector<8x128xbf16>
    %cst_10 = arith.constant dense<0.000000e+00> : vector<8x128xf32>
    %18 = tpu.matmul %17, %4, %cst_10 {dimension_numbers = #tpu.dot_dimension_numbers<[1], [0], [0], [1], [0, 0, 1, 1], [], []>} : vector<8x128xbf16>, vector<128x128xbf16>, vector<8x128xf32> -> vector<8x128xf32>
    %19 = vector.broadcast %7 : vector<1x128xf32> to vector<8x128xf32>
    %20 = arith.addf %18, %19 : vector<8x128xf32>
    %c0_11 = arith.constant 0 : index
    %c0_12 = arith.constant 0 : index
    %21 = vector.load %arg4[%c0_11, %c0_12] : memref<8x128xf32, #tpu.memory_space<vmem>>, vector<8x128xf32>
    tpu.vector_store %arg4[%c0_11, %c0_12], %20 {strides = array<i32>} : memref<8x128xf32, #tpu.memory_space<vmem>>, vector<8x128xf32>,
    return
  }
  func.func @transform_0(%arg0: i32) -> (i32, i32) {
    %c0_i32 = arith.constant 0 : i32
    %c0_i32_0 = arith.constant 0 : i32
    return %arg0, %c0_i32 : i32, i32
  }
  func.func @transform_1(%arg0: i32) -> (i32, i32) {
    %c0_i32 = arith.constant 0 : i32
    %c0_i32_0 = arith.constant 0 : i32
    %c0_i32_1 = arith.constant 0 : i32
    return %c0_i32, %c0_i32_0 : i32, i32
  }
  func.func @transform_2(%arg0: i32) -> (i32, i32) {
    %c0_i32 = arith.constant 0 : i32
    %c0_i32_0 = arith.constant 0 : i32
    %c0_i32_1 = arith.constant 0 : i32
    return %c0_i32, %c0_i32_0 : i32, i32
  }
  func.func @transform_3(%arg0: i32) -> (i32, i32) {
    %c0_i32 = arith.constant 0 : i32
    %c0_i32_0 = arith.constant 0 : i32
    return %arg0, %c0_i32 : i32, i32
  }
}

</mosaic_0001>

<llo_original>
// kernel: tpu_custom_call.1
$region0: #{tpu_custom_call.1}
  #allocation0 [shape = 'u32[]', space=smem, size = 0x4, offset = 0x4, fixed_abs, tag = 'smem constant byte address 0x4 - core index']
  #allocation1 [shape = 'u32[144,128]{1,0:T(1,128)}', space=vmem, size = 0x12000, scoped, tag = 'internal scratch']
  %s0 = inlined_call_operand.hbm [shape: f32[8,32], index: 0, kind: input, shape index: {}]
  %s1 = inlined_call_operand.hbm [shape: bf16[288,128], index: 1, kind: input, shape index: {}]
  %s2 = inlined_call_operand.hbm [shape: f32[8,128], index: 2, kind: input, shape index: {}]
  %s3 = inlined_call_operand.hbm [shape: f32[8,128], index: 3, kind: output, shape index: {}]
  %s4 = sld [smem:[#allocation0]]
  $region34: #{tpu_custom_call.1} parent=0
    _
  %s6 = ssub.s32 1, %s4
  %s7 = scalar_select 0, %s6, %s4
  $region1: #{tpu_custom_call.1} parent=0
    #allocation2 [shape = 'u8[4096]{0}', space=vmem, size = 0x1000, scoped, tag = 'input window, operand 0, single buffered']
    #allocation3 [shape = 's32[1]{0}', space=sflag, size = 0x4, scoped, tag = 'scoped memory for tpu_custom_call.1']
    #allocation4 [shape = 's32[1]{0}', space=sflag, size = 0x4, scoped, tag = 'scoped memory for tpu_custom_call.1']
    #allocation5 [shape = 'u8[73728]{0}', space=vmem, size = 0x12000, scoped, tag = 'input window, operand 1, single buffered']
    #allocation6 [shape = 's32[1]{0}', space=sflag, size = 0x4, scoped, tag = 'scoped memory for tpu_custom_call.1']
    #allocation7 [shape = 'u8[4096]{0}', space=vmem, size = 0x1000, scoped, tag = 'input window, operand 2, single buffered']
    #allocation8 [shape = 'u8[4096]{0}', space=vmem, size = 0x1000, scoped, tag = 'output window, operand 0, single buffered']
    %8 = vsyncpa [#allocation3], 0
    %9 = vsyncpa [#allocation6], 0
    %10 = vsyncpa [#allocation4], 0
    // Predicated region
    $region2: #{tpu_custom_call.1} parent=1 // pred_check
      _
    $region3: #{tpu_custom_call.1} parent=1 // pred_check_branch
      %12 = sbr.rel (0) target = $region5
    $region4: #{tpu_custom_call.1} parent=1 // pred_region
      %s14 = ssub.s32 128, 128
      %15 = vsyncadd [#allocation3], %s14
      %s17 = sshll.u32 [#allocation2], 4
      %s18 = int_to_ptr.vmem [resolvable:$true] %s17
      %20 = dma.hbm_to_vmem [thread:$0]  %s0, 128, %s18, [#allocation3]
    $region5: #{tpu_custom_call.1} parent=1 // pred_fallthru
      _
    // Predicated region
    $region6: #{tpu_custom_call.1} parent=1 // pred_check
      _
    $region7: #{tpu_custom_call.1} parent=1 // pred_check_branch
      %22 = sbr.rel (0) target = $region9
    $region8: #{tpu_custom_call.1} parent=1 // pred_region
      %s24 = ssub.s32 2304, 2304
      %25 = vsyncadd [#allocation6], %s24
      %s26 = sshll.u32 [#allocation5], 4
      %s27 = int_to_ptr.vmem [resolvable:$true] %s26
      %32 = dma.hbm_to_vmem [thread:$0]  %s1, 2304, %s27, [#allocation6], 64, 64, 4
    $region9: #{tpu_custom_call.1} parent=1 // pred_fallthru
      _
    // Predicated region
    $region10: #{tpu_custom_call.1} parent=1 // pred_check
      _
    $region11: #{tpu_custom_call.1} parent=1 // pred_check_branch
      %34 = sbr.rel (0) target = $region13
    $region12: #{tpu_custom_call.1} parent=1 // pred_region
      %s36 = ssub.s32 128, 128
      %37 = vsyncadd [#allocation6], %s36
      %s39 = sshll.u32 [#allocation7], 4
      %s40 = int_to_ptr.vmem [resolvable:$true] %s39
      %42 = dma.hbm_to_vmem [thread:$0]  %s2, 128, %s40, [#allocation6]
    $region13: #{tpu_custom_call.1} parent=1 // pred_fallthru
      _
    // Predicated region
    $region14: #{tpu_custom_call.1} parent=1 // pred_check
      _
    $region15: #{tpu_custom_call.1} parent=1 // pred_check_branch
      %44 = sbr.rel (0) target = $region17
    $region16: #{tpu_custom_call.1} parent=1 // pred_region
      %45 = dma.done [#allocation3], 128
    $region17: #{tpu_custom_call.1} parent=1 // pred_fallthru
      _
    // Predicated region
    $region18: #{tpu_custom_call.1} parent=1 // pred_check
      _
    $region19: #{tpu_custom_call.1} parent=1 // pred_check_branch
      %47 = sbr.rel (0) target = $region21
    $region20: #{tpu_custom_call.1} parent=1 // pred_region
      %48 = dma.done [#allocation6], 2304
    $region21: #{tpu_custom_call.1} parent=1 // pred_fallthru
      _
    // Predicated region
    $region22: #{tpu_custom_call.1} parent=1 // pred_check
      _
    $region23: #{tpu_custom_call.1} parent=1 // pred_check_branch
      %50 = sbr.rel (0) target = $region25
    $region24: #{tpu_custom_call.1} parent=1 // pred_region
      %51 = dma.done [#allocation6], 128
    $region25: #{tpu_custom_call.1} parent=1 // pred_fallthru
      _
    %v53 = vld [vmem:[#allocation2] sm:$0xff]
    %v54 = vpack.c.bf16 %v53, %v53
    %v55 = vld [vmem:[#allocation5] sm:$0xf]
    %v56 = vld [vmem:[#allocation5 + $0x4] sm:$0xf]
    %v57 = vld [vmem:[#allocation5 + $0x8] sm:$0xf]
    %v58 = vld [vmem:[#allocation5 + $0xc] sm:$0xf]
    %v59 = vld [vmem:[#allocation5 + $0x10] sm:$0xf]
    %v60 = vld [vmem:[#allocation5 + $0x14] sm:$0xf]
    %v61 = vld [vmem:[#allocation5 + $0x18] sm:$0xf]
    %v62 = vld [vmem:[#allocation5 + $0x1c] sm:$0xf]
    %v63 = vld [vmem:[#allocation5 + $0x20] sm:$0xf]
    %v64 = vld [vmem:[#allocation5 + $0x24] sm:$0xf]
    %v65 = vld [vmem:[#allocation5 + $0x28] sm:$0xf]
    %v66 = vld [vmem:[#allocation5 + $0x2c] sm:$0xf]
    %v67 = vld [vmem:[#allocation5 + $0x30] sm:$0xf]
    %v68 = vld [vmem:[#allocation5 + $0x34] sm:$0xf]
    %v69 = vld [vmem:[#allocation5 + $0x38] sm:$0xf]
    %v70 = vld [vmem:[#allocation5 + $0x3c] sm:$0xf]
    %v71 = vld [vmem:[#allocation5 + $0x40] sm:$0xf]
    %v72 = vld [vmem:[#allocation5 + $0x44] sm:$0xf]
    %v73 = vld [vmem:[#allocation5 + $0x48] sm:$0xf]
    %v74 = vld [vmem:[#allocation5 + $0x4c] sm:$0xf]
    %v75 = vld [vmem:[#allocation5 + $0x50] sm:$0xf]
    %v76 = vld [vmem:[#allocation5 + $0x54] sm:$0xf]
    %v77 = vld [vmem:[#allocation5 + $0x58] sm:$0xf]
    %v78 = vld [vmem:[#allocation5 + $0x5c] sm:$0xf]
    %v79 = vld [vmem:[#allocation5 + $0x60] sm:$0xf]
    %v80 = vld [vmem:[#allocation5 + $0x64] sm:$0xf]
    %v81 = vld [vmem:[#allocation5 + $0x68] sm:$0xf]
    %v82 = vld [vmem:[#allocation5 + $0x6c] sm:$0xf]
    %v83 = vld [vmem:[#allocation5 + $0x70] sm:$0xf]
    %v84 = vld [vmem:[#allocation5 + $0x74] sm:$0xf]
    %v85 = vld [vmem:[#allocation5 + $0x78] sm:$0xf]
    %v86 = vld [vmem:[#allocation5 + $0x7c] sm:$0xf]
    %v87 = vld [vmem:[#allocation5 + $0x80] sm:$0xf]
    %v88 = vld [vmem:[#allocation5 + $0x84] sm:$0xf]
    %v89 = vld [vmem:[#allocation5 + $0x88] sm:$0xf]
    %v90 = vld [vmem:[#allocation5 + $0x8c] sm:$0xf]
    %v91 = vld [vmem:[#allocation7] sm:$0x1]
    %v92 = vld [vmem:[#allocation7 + $0x1] sm:$0x1]
    %v93 = vld [vmem:[#allocation7 + $0x2] sm:$0x1]
    %v94 = vlaneseq
    %v95 = vshrl.u32 %v94, 7
    %v96 = vsub.s32 0, %v95
    %v97 = vrot.slane %v91, %v96
    %v102 = vunpack.c.l.b16 %v55
    %v103 = vunpack.c.l.b16 %v56
    %v104 = vunpack.c.l.b16 %v57
    %v105 = vunpack.c.l.b16 %v58
    %v106 = vpack.c.b16 %v103, %v102
    %v107 = vpack.c.b16 %v105, %v104
    %vm110 = vcmask 261120
    %v112 = vsel %vm110, %v54, 0
    %114 = vmatprep.subr.bf16.mxu0 0
    %115 = vmatpush1.bf16.msra.mxu0 %v106
    %116 = vmatprep.subr.bf16.mxu0 0
    %117 = vmatpush1.bf16.msra.mxu0 %v107
    %118 = vmatprep.subr.bf16.mxu0 0
    %119 = vmatpush1.bf16.msra.mxu0 0
    %120 = vmatprep.subr.bf16.mxu0 0
    %121 = vmatpush1.bf16.msra.mxu0 0
    %122 = vmatprep.subr.bf16.mxu0 0
    %123 = vmatpush1.bf16.msra.mxu0 0
    %124 = vmatprep.subr.bf16.mxu0 0
    %125 = vmatpush1.bf16.msra.mxu0 0
    %126 = vmatprep.subr.bf16.mxu0 0
    %127 = vmatpush1.bf16.msra.mxu0 0
    %128 = vmatprep.subr.bf16.mxu0 0
    %129 = vmatpush1.bf16.msra.mxu0 0
    %130 = vmatprep.subr.bf16.mxu0 0
    %131 = vmatpush1.bf16.msra.mxu0 0
    %132 = vmatprep.subr.bf16.mxu0 0
    %133 = vmatpush1.bf16.msra.mxu0 0
    %134 = vmatprep.subr.bf16.mxu0 0
    %135 = vmatpush1.bf16.msra.mxu0 0
    %136 = vmatprep.subr.bf16.mxu0 0
    %137 = vmatpush1.bf16.msra.mxu0 0
    %138 = vmatprep.subr.bf16.mxu0 0
    %139 = vmatpush1.bf16.msra.mxu0 0
    %140 = vmatprep.subr.bf16.mxu0 0
    %141 = vmatpush1.bf16.msra.mxu0 0
    %142 = vmatprep.subr.bf16.mxu0 0
    %143 = vmatpush1.bf16.msra.mxu0 0
    %144 = vmatprep.subr.bf16.mxu0 0
    %145 = vmatpush1.bf16.msra.mxu0 0
    %146 = vmatprep.mubr.bf16.mxu0 0
    %147 = vmatmul.mubr.bf16.gmra.mrb[0].mxu0 %v112
    %v148 = vpop.f32.mrb[0].mxu0
    %v149 = vadd.f32 %v97, %v148
    %v150 = vpop.f32.mrb[0].mxu0
    %v151 = vpop.f32.mrb[0].mxu0
    %v152 = vpop.f32.mrb[0].mxu0
    %153 = vdwg.mxu0
    %v154 = vtanh.pop %v149
    %v155 = vpack.c.bf16 %v154, %v154
    %v156 = vlaneseq
    %v157 = vshrl.u32 %v156, 7
    %v158 = vsub.s32 0, %v157
    %v159 = vrot.slane %v92, %v158
    %v176 = vunpack.c.l.b16 %v59
    %v177 = vunpack.c.l.b16 %v60
    %v178 = vunpack.c.l.b16 %v61
    %v179 = vunpack.c.l.b16 %v62
    %v180 = vunpack.c.l.b16 %v63
    %v181 = vunpack.c.l.b16 %v64
    %v182 = vunpack.c.l.b16 %v65
    %v183 = vunpack.c.l.b16 %v66
    %v184 = vunpack.c.l.b16 %v67
    %v185 = vunpack.c.l.b16 %v68
    %v186 = vunpack.c.l.b16 %v69
    %v187 = vunpack.c.l.b16 %v70
    %v188 = vunpack.c.l.b16 %v71
    %v189 = vunpack.c.l.b16 %v72
    %v190 = vunpack.c.l.b16 %v73
    %v191 = vunpack.c.l.b16 %v74
    %v192 = vpack.c.b16 %v177, %v176
    %v193 = vpack.c.b16 %v179, %v178
    %v194 = vpack.c.b16 %v181, %v180
    %v195 = vpack.c.b16 %v183, %v182
    %v196 = vpack.c.b16 %v185, %v184
    %v197 = vpack.c.b16 %v187, %v186
    %v198 = vpack.c.b16 %v189, %v188
    %v199 = vpack.c.b16 %v191, %v190
    %208 = vmatprep.subr.bf16.mxu0 0
    %209 = vmatpush1.bf16.msra.mxu0 %v192
    %210 = vmatprep.subr.bf16.mxu0 0
    %211 = vmatpush1.bf16.msra.mxu0 %v193
    %212 = vmatprep.subr.bf16.mxu0 0
    %213 = vmatpush1.bf16.msra.mxu0 %v194
    %214 = vmatprep.subr.bf16.mxu0 0
    %215 = vmatpush1.bf16.msra.mxu0 %v195
    %216 = vmatprep.subr.bf16.mxu0 0
    %217 = vmatpush1.bf16.msra.mxu0 %v196
    %218 = vmatprep.subr.bf16.mxu0 0
    %219 = vmatpush1.bf16.msra.mxu0 %v197
    %220 = vmatprep.subr.bf16.mxu0 0
    %221 = vmatpush1.bf16.msra.mxu0 %v198
    %222 = vmatprep.subr.bf16.mxu0 0
    %223 = vmatpush1.bf16.msra.mxu0 %v199
    %224 = vmatprep.subr.bf16.mxu0 0
    %225 = vmatpush1.bf16.msra.mxu0 0
    %226 = vmatprep.subr.bf16.mxu0 0
    %227 = vmatpush1.bf16.msra.mxu0 0
    %228 = vmatprep.subr.bf16.mxu0 0
    %229 = vmatpush1.bf16.msra.mxu0 0
    %230 = vmatprep.subr.bf16.mxu0 0
    %231 = vmatpush1.bf16.msra.mxu0 0
    %232 = vmatprep.subr.bf16.mxu0 0
    %233 = vmatpush1.bf16.msra.mxu0 0
    %234 = vmatprep.subr.bf16.mxu0 0
    %235 = vmatpush1.bf16.msra.mxu0 0
    %236 = vmatprep.subr.bf16.mxu0 0
    %237 = vmatpush1.bf16.msra.mxu0 0
    %238 = vmatprep.subr.bf16.mxu0 0
    %239 = vmatpush1.bf16.msra.mxu0 0
    %240 = vmatprep.mubr.bf16.mxu0 0
    %241 = vmatmul.mubr.bf16.gmra.mrb[0].mxu0 %v155
    %v242 = vpop.f32.mrb[0].mxu0
    %v243 = vadd.f32 %v159, %v242
    %v244 = vpop.f32.mrb[0].mxu0
    %v245 = vpop.f32.mrb[0].mxu0
    %v246 = vpop.f32.mrb[0].mxu0
    %247 = vdwg.mxu0
    %v248 = vtanh.pop %v243
    %v249 = vpack.c.bf16 %v248, %v248
    %v250 = vlaneseq
    %v251 = vshrl.u32 %v250, 7
    %v252 = vsub.s32 0, %v251
    %v253 = vrot.slane %v93, %v252
    %v270 = vunpack.c.l.b16 %v75
    %v271 = vunpack.c.l.b16 %v76
    %v272 = vunpack.c.l.b16 %v77
    %v273 = vunpack.c.l.b16 %v78
    %v274 = vunpack.c.l.b16 %v79
    %v275 = vunpack.c.l.b16 %v80
    %v276 = vunpack.c.l.b16 %v81
    %v277 = vunpack.c.l.b16 %v82
    %v278 = vunpack.c.l.b16 %v83
    %v279 = vunpack.c.l.b16 %v84
    %v280 = vunpack.c.l.b16 %v85
    %v281 = vunpack.c.l.b16 %v86
    %v282 = vunpack.c.l.b16 %v87
    %v283 = vunpack.c.l.b16 %v88
    %v284 = vunpack.c.l.b16 %v89
    %v285 = vunpack.c.l.b16 %v90
    %v286 = vpack.c.b16 %v271, %v270
    %v287 = vpack.c.b16 %v273, %v272
    %v288 = vpack.c.b16 %v275, %v274
    %v289 = vpack.c.b16 %v277, %v276
    %v290 = vpack.c.b16 %v279, %v278
    %v291 = vpack.c.b16 %v281, %v280
    %v292 = vpack.c.b16 %v283, %v282
    %v293 = vpack.c.b16 %v285, %v284
    %302 = vmatprep.subr.bf16.mxu0 0
    %303 = vmatpush1.bf16.msra.mxu0 %v286
    %304 = vmatprep.subr.bf16.mxu0 0
    %305 = vmatpush1.bf16.msra.mxu0 %v287
    %306 = vmatprep.subr.bf16.mxu0 0
    %307 = vmatpush1.bf16.msra.mxu0 %v288
    %308 = vmatprep.subr.bf16.mxu0 0
    %309 = vmatpush1.bf16.msra.mxu0 %v289
    %310 = vmatprep.subr.bf16.mxu0 0
    %311 = vmatpush1.bf16.msra.mxu0 %v290
    %312 = vmatprep.subr.bf16.mxu0 0
    %313 = vmatpush1.bf16.msra.mxu0 %v291
    %314 = vmatprep.subr.bf16.mxu0 0
    %315 = vmatpush1.bf16.msra.mxu0 %v292
    %316 = vmatprep.subr.bf16.mxu0 0
    %317 = vmatpush1.bf16.msra.mxu0 %v293
    %318 = vmatprep.subr.bf16.mxu0 0
    %319 = vmatpush1.bf16.msra.mxu0 0
    %320 = vmatprep.subr.bf16.mxu0 0
    %321 = vmatpush1.bf16.msra.mxu0 0
    %322 = vmatprep.subr.bf16.mxu0 0
    %323 = vmatpush1.bf16.msra.mxu0 0
    %324 = vmatprep.subr.bf16.mxu0 0
    %325 = vmatpush1.bf16.msra.mxu0 0
    %326 = vmatprep.subr.bf16.mxu0 0
    %327 = vmatpush1.bf16.msra.mxu0 0
    %328 = vmatprep.subr.bf16.mxu0 0
    %329 = vmatpush1.bf16.msra.mxu0 0
    %330 = vmatprep.subr.bf16.mxu0 0
    %331 = vmatpush1.bf16.msra.mxu0 0
    %332 = vmatprep.subr.bf16.mxu0 0
    %333 = vmatpush1.bf16.msra.mxu0 0
    %334 = vmatprep.mubr.bf16.mxu0 0
    %335 = vmatmul.mubr.bf16.gmra.mrb[0].mxu0 %v249
    %v336 = vpop.f32.mrb[0].mxu0
    %v337 = vadd.f32 %v253, %v336
    %v338 = vpop.f32.mrb[0].mxu0
    %v339 = vpop.f32.mrb[0].mxu0
    %v340 = vpop.f32.mrb[0].mxu0
    %341 = vdwg.mxu0
    %342 = vst [vmem:[#allocation8] sm:$0xff] %v337
    // Predicated region
    $region26: #{tpu_custom_call.1} parent=1 // pred_check
      _
    $region27: #{tpu_custom_call.1} parent=1 // pred_check_branch
      %344 = sbr.rel (0) target = $region29
    $region28: #{tpu_custom_call.1} parent=1 // pred_region
      %s346 = ssub.s32 128, 128
      %347 = vsyncadd [#allocation4], %s346
      %s349 = sshll.u32 [#allocation8], 4
      %s350 = int_to_ptr.vmem [resolvable:$true] %s349
      %352 = dma.vmem_to_hbm [thread:$0]  %s350, 128, %s3, [#allocation4]
    $region29: #{tpu_custom_call.1} parent=1 // pred_fallthru
      _
    // Predicated region
    $region30: #{tpu_custom_call.1} parent=1 // pred_check
      _
    $region31: #{tpu_custom_call.1} parent=1 // pred_check_branch
      %354 = sbr.rel (0) target = $region33
    $region32: #{tpu_custom_call.1} parent=1 // pred_region
      %355 = dma.done [#allocation4], 128
    $region33: #{tpu_custom_call.1} parent=1 // pred_fallthru
      _
    %356 = vsyncpa [#allocation3], 1
    %357 = vsyncpa [#allocation6], 1
    %358 = vsyncpa [#allocation4], 1

</llo_original>
